<compile_context>
chip_gen: v5e
topology: v5e:2x2
jax: 0.10.0
libtpu: 0.0.40
codegen_flags: <defaults>
</compile_context>

<pallas_src>
import functools
import math

import jax
import jax.numpy as jnp
from jax.experimental import pallas as pl
from jax.experimental.pallas import tpu as pltpu


def _stable_squareplus(x):
    """squareplus(x) = 0.5*(x + sqrt(x^2+4)), cancellation-free for x < 0."""
    root = jnp.sqrt(x * x + 4.0)
    return jnp.where(x >= 0, 0.5 * (x + root), 2.0 / (root - x))


def _atom_kernel(eps_ref, mu_ref, scale_ref, w_ref, b_ref, h_ref):
    """One row tile of the forward pass.

    eps_ref   : (rows_blk, hdim)  streamed standard-normal noise
    mu_ref    : (rows_blk, hdim)  mu replicated across the batch tile (resident)
    scale_ref : (rows_blk, hdim)  squareplus(stu) replicated (resident)
    w_ref     : (hdim, k)         collapsed linear map (resident)
    b_ref     : (1, k)            bias (resident)
    h_ref     : (rows_blk, k)     streamed output
    """
    # Reparameterized samples, kept entirely in vregs (no scratch, no scatter).
    smp = mu_ref[...] + scale_ref[...] * eps_ref[...]
    # One MXU matmul per grid step; f32 accumulation.
    h = jnp.dot(smp, w_ref[...], preferred_element_type=jnp.float32)
    h_ref[...] = (h + b_ref[...].astype(jnp.float32)).astype(h_ref.dtype)


def atom_normal_forward(eps, muu, stu, w, b, *, mollify: float = 0.0,
                        compute_kl: bool = False, block_batch=None):
    """Fused AtomNormal forward.

    eps : (batch, nintv, hdim) standard-normal noise (the rsample epsilon)
    muu : (nintv, hdim)
    stu : (nintv, hdim)
    w   : (hdim, k)
    b   : (1, k)
    Returns (h, kl) with h : (batch, nintv, k).
    """
    del mollify  # TODO(synk): mollify only gates activations of the nonlinear
    # approximator; with nonlinear=False / activate_mollify=False it is a no-op.

    batch, nintv, hdim = eps.shape
    k = w.shape[1]
    out_dtype = jnp.result_type(eps.dtype, muu.dtype, w.dtype)

    # ---- row-tile selection --------------------------------------------------
    # Rows per block = block_batch * nintv must be a multiple of 8 (sublane
    # alignment) unless the block spans the full batch.
    align = 8 // math.gcd(nintv, 8)
    if block_batch is None:
        block_batch = max(align, 2048 // max(nintv, 1))   # ~2K rows/step target
    if block_batch >= batch:
        block_batch = batch                                # single full block
    else:
        block_batch = max(align, (block_batch // align) * align)
    rows_blk = block_batch * nintv
    rows_all = batch * nintv
    grid = (pl.cdiv(batch, block_batch),)
    # VMEM per step (f32, double-buffered eps/out + resident mu/scale/W/b) stays
    # in the tens-of-KB range at default shapes — far below v7x's 64 MiB VMEM,
    # so no explicit vmem_limit_bytes is needed; re-derive if hdim/k grow.

    # Tiny, batch-independent parameter transforms (once per call): stable
    # squareplus and replication over ONE batch tile, so the kernel body needs
    # no per-batch broadcast logic at all.
    scale = _stable_squareplus(stu.astype(jnp.float32)).astype(stu.dtype)
    mu_rep = jnp.broadcast_to(muu[None], (block_batch, nintv, hdim)) \
                .reshape(rows_blk, hdim)
    scale_rep = jnp.broadcast_to(scale[None], (block_batch, nintv, hdim)) \
                   .reshape(rows_blk, hdim)

    eps2d = eps.reshape(rows_all, hdim)   # free row-major HBM reshape

    h2d = pl.pallas_call(
        _atom_kernel,
        out_shape=jax.ShapeDtypeStruct((rows_all, k), out_dtype),
        grid=grid,
        in_specs=[
            pl.BlockSpec((rows_blk, hdim), lambda i: (i, 0)),  # eps (streamed)
            pl.BlockSpec((rows_blk, hdim), lambda i: (0, 0)),  # mu_rep (resident)
            pl.BlockSpec((rows_blk, hdim), lambda i: (0, 0)),  # scale_rep (resident)
            pl.BlockSpec((hdim, k), lambda i: (0, 0)),         # W (resident)
            pl.BlockSpec((1, k), lambda i: (0, 0)),            # bias (resident)
        ],
        out_specs=pl.BlockSpec((rows_blk, k), lambda i: (i, 0)),
        compiler_params=pltpu.CompilerParams(
            dimension_semantics=("parallel",)),
    )(eps2d, mu_rep, scale_rep, w, b)

    h = h2d.reshape(batch, nintv, k)

    if compute_kl:
        scale_f = _stable_squareplus(stu.astype(jnp.float32))
        mu_f = muu.astype(jnp.float32)
        kl_elem = -jnp.log(scale_f) + 0.5 * (scale_f * scale_f + mu_f * mu_f) - 0.5
        kl = jnp.mean(jnp.sum(kl_elem, axis=-1))
    else:
        kl = 0.0
    return h, kl


def _reference(eps, muu, stu, w, b):
    scale = 0.5 * (stu + jnp.sqrt(stu * stu + 4.0))
    samples = muu[None] + scale[None] * eps
    return jnp.einsum("bnh,hk->bnk", samples, w) + b[None]


if __name__ == "__main__":
    # Module defaults: hdim=10, k=10, nintv=10 (small shapes).
    hdim, k, nintv = 10, 10, 10
    batch = 8

    key = jax.random.PRNGKey(0)
    k_mu, k_st, k_w, k_b, k_eps = jax.random.split(key, 5)

    # Deterministic synthetic "parameters".
    muu = jax.random.normal(k_mu, (nintv, hdim), jnp.float32)
    stu = jax.random.normal(k_st, (nintv, hdim), jnp.float32)
    w = jax.random.normal(k_w, (hdim, k), jnp.float32) * (1.0 / jnp.sqrt(hdim))
    b = jax.random.normal(k_b, (1, k), jnp.float32) * 0.01

    # rsample epsilon for the reparameterization trick.
    eps = jax.random.normal(k_eps, (batch, nintv, hdim), jnp.float32)

    # block_batch=4 -> 40 rows / block, grid=(2,): exercises the pipelined grid.
    fwd = jax.jit(functools.partial(atom_normal_forward,
                                    compute_kl=False, block_batch=4))
    h, kl = fwd(eps, muu, stu, w, b)
    h = jax.block_until_ready(h)

    # Sanity check against a pure-JAX reference.
    h_ref = _reference(eps, muu, stu, w, b)
    assert h.shape == (batch, nintv, k)
    assert jnp.allclose(h, h_ref, atol=1e-4, rtol=1e-4), "mismatch vs reference"

    print("KERNEL_OK")
</pallas_src>

<mosaic_0001>
module attributes {stable_mosaic.version = 11 : i64} {
  func.func @_atom_kernel(%arg0: i32, %arg1: memref<40x10xf32, #tpu.memory_space<vmem>>, %arg2: memref<40x10xf32, #tpu.memory_space<vmem>>, %arg3: memref<40x10xf32, #tpu.memory_space<vmem>>, %arg4: memref<10x10xf32, #tpu.memory_space<vmem>>, %arg5: memref<1x10xf32, #tpu.memory_space<vmem>>, %arg6: memref<40x10xf32, #tpu.memory_space<vmem>>) attributes {dimension_semantics = [#tpu.dimension_semantics<parallel>], iteration_bounds = array<i64: 2>, scalar_prefetch = 0 : i64, scratch_operands = 0 : i64, tpu.core_type = #tpu.core_type<tc>, window_params = [{transform_indices = @transform_0, window_bounds = array<i64: 40, 10>}, {pipeline_mode = #tpu.pipeline_mode<synchronous>, transform_indices = @transform_1, window_bounds = array<i64: 40, 10>}, {pipeline_mode = #tpu.pipeline_mode<synchronous>, transform_indices = @transform_2, window_bounds = array<i64: 40, 10>}, {pipeline_mode = #tpu.pipeline_mode<synchronous>, transform_indices = @transform_3, window_bounds = array<i64: 10, 10>}, {pipeline_mode = #tpu.pipeline_mode<synchronous>, transform_indices = @transform_4, window_bounds = array<i64: 1, 10>}, {transform_indices = @transform_5, window_bounds = array<i64: 40, 10>}]} {
    %c0 = arith.constant 0 : index
    %c0_0 = arith.constant 0 : index
    %0 = vector.load %arg2[%c0, %c0_0] : memref<40x10xf32, #tpu.memory_space<vmem>>, vector<40x10xf32>
    %c0_1 = arith.constant 0 : index
    %c0_2 = arith.constant 0 : index
    %1 = vector.load %arg3[%c0_1, %c0_2] : memref<40x10xf32, #tpu.memory_space<vmem>>, vector<40x10xf32>
    %c0_3 = arith.constant 0 : index
    %c0_4 = arith.constant 0 : index
    %2 = vector.load %arg1[%c0_3, %c0_4] : memref<40x10xf32, #tpu.memory_space<vmem>>, vector<40x10xf32>
    %3 = arith.mulf %1, %2 : vector<40x10xf32>
    %4 = arith.addf %0, %3 : vector<40x10xf32>
    %c0_5 = arith.constant 0 : index
    %c0_6 = arith.constant 0 : index
    %5 = vector.load %arg4[%c0_5, %c0_6] : memref<10x10xf32, #tpu.memory_space<vmem>>, vector<10x10xf32>
    %cst = arith.constant dense<0.000000e+00> : vector<40x10xf32>
    %6 = tpu.matmul %4, %5, %cst {dimension_numbers = #tpu.dot_dimension_numbers<[1], [0], [0], [1], [0, 0, 1, 1], [], []>} : vector<40x10xf32>, vector<10x10xf32>, vector<40x10xf32> -> vector<40x10xf32>
    %c0_7 = arith.constant 0 : index
    %c0_8 = arith.constant 0 : index
    %7 = vector.load %arg5[%c0_7, %c0_8] : memref<1x10xf32, #tpu.memory_space<vmem>>, vector<1x10xf32>
    %8 = vector.broadcast %7 : vector<1x10xf32> to vector<40x10xf32>
    %9 = arith.addf %6, %8 : vector<40x10xf32>
    %c0_9 = arith.constant 0 : index
    %c0_10 = arith.constant 0 : index
    %10 = vector.load %arg6[%c0_9, %c0_10] : memref<40x10xf32, #tpu.memory_space<vmem>>, vector<40x10xf32>
    tpu.vector_store %arg6[%c0_9, %c0_10], %9 {strides = array<i32>} : memref<40x10xf32, #tpu.memory_space<vmem>>, vector<40x10xf32>,
    return
  }
  func.func @transform_0(%arg0: i32) -> (i32, i32) {
    %c0_i32 = arith.constant 0 : i32
    %c0_i32_0 = arith.constant 0 : i32
    return %arg0, %c0_i32 : i32, i32
  }
  func.func @transform_1(%arg0: i32) -> (i32, i32) {
    %c0_i32 = arith.constant 0 : i32
    %c0_i32_0 = arith.constant 0 : i32
    %c0_i32_1 = arith.constant 0 : i32
    return %c0_i32, %c0_i32_0 : i32, i32
  }
  func.func @transform_2(%arg0: i32) -> (i32, i32) {
    %c0_i32 = arith.constant 0 : i32
    %c0_i32_0 = arith.constant 0 : i32
    %c0_i32_1 = arith.constant 0 : i32
    return %c0_i32, %c0_i32_0 : i32, i32
  }
  func.func @transform_3(%arg0: i32) -> (i32, i32) {
    %c0_i32 = arith.constant 0 : i32
    %c0_i32_0 = arith.constant 0 : i32
    %c0_i32_1 = arith.constant 0 : i32
    return %c0_i32, %c0_i32_0 : i32, i32
  }
  func.func @transform_4(%arg0: i32) -> (i32, i32) {
    %c0_i32 = arith.constant 0 : i32
    %c0_i32_0 = arith.constant 0 : i32
    %c0_i32_1 = arith.constant 0 : i32
    return %c0_i32, %c0_i32_0 : i32, i32
  }
  func.func @transform_5(%arg0: i32) -> (i32, i32) {
    %c0_i32 = arith.constant 0 : i32
    %c0_i32_0 = arith.constant 0 : i32
    return %arg0, %c0_i32 : i32, i32
  }
}

</mosaic_0001>

<llo_original>
// kernel: atom_normal_forward.1
$region0: #{atom_normal_forward.1}
  #allocation0 [shape = 'u32[]', space=smem, size = 0x4, offset = 0x4, fixed_abs, tag = 'smem constant byte address 0x4 - core index']
  #allocation1 [shape = 'u32[72,128]{1,0:T(1,128)}', space=vmem, size = 0x9000, scoped, tag = 'internal scratch']
  %s0 = inlined_call_operand.vmem [shape: f32[80,10], index: 0, kind: input, shape index: {}]
  %s1 = inlined_call_operand.vmem [shape: f32[40,10], index: 1, kind: input, shape index: {}]
  %s2 = inlined_call_operand.vmem [shape: f32[40,10], index: 2, kind: input, shape index: {}]
  %s3 = inlined_call_operand.vmem [shape: f32[10,10], index: 3, kind: input, shape index: {}]
  %s4 = inlined_call_operand.vmem [shape: f32[1,10], index: 4, kind: input, shape index: {}]
  %s5 = inlined_call_operand.vmem [shape: f32[80,10], index: 5, kind: output, shape index: {}]
  %s6 = sld [smem:[#allocation0]]
  $region53: #{atom_normal_forward.1} parent=0
    _
  %s8 = ssub.s32 1, %s6
  %s9 = scalar_select 0, %s8, %s6
  loop: start=0, step=1, limit=4
  $region2: #{atom_normal_forward.1} parent=0 // loop_pre_header
    _
  $region3: #{atom_normal_forward.1} parent=0 // loop_header
    %s11 = sphi 0, %s15
    %p12 = scmp.ge.s32.totalorder %s11, 4
    %s21 = sphi 0, %s23
    %s24 = sphi 0, %s21
    %s25 = sphi 0, %s24
    %s41 = sphi 0, %s25
    %s45 = sphi 0, %s45
    %s47 = sphi 0, %s45
    %s48 = sphi 0, %s47
    %s62 = sphi 0, %s48
    %s66 = sphi 0, %s66
    %s68 = sphi 0, %s66
    %s69 = sphi 0, %s68
    %s83 = sphi 0, %s69
    %s87 = sphi 0, %s87
    %s89 = sphi 0, %s87
    %s90 = sphi 0, %s89
    %s104 = sphi 0, %s90
    %s108 = sphi 0, %s108
    %s110 = sphi 0, %s108
    %s111 = sphi 0, %s110
    %s125 = sphi 0, %s111
    %s131 = sphi 0, %s133
    %s134 = sphi 0, %s131
    %s135 = sphi 0, %s134
    %s151 = sphi 0, %s135
  $region4: #{atom_normal_forward.1} parent=0 // loop_header_branch
    %14 = sbr.rel (%p12) target = $region8
  $region5: #{atom_normal_forward.1} parent=0 // loop_body
    %s16 = ssub.s32 %s11, 1
    %s17 = ssub.s32 %s11, 2
    %s18 = sadd.s32 %s11, 1
    %s19 = ssub.s32 %s11, %s18
    %p20 = scmp.eq.s32.totalorder %s19, 0
    %s22 = sadd.s32 %s21, 1
    %s23 = scalar_select %p20, %s21, %s22
    %p26 = pneg %p20
    %p27 = scmp.eq.s32.totalorder %s11, 1
    %p28 = por %p26, %p27
    %p29 = scmp.ne.s32.totalorder %s21, %s24
    %p30 = scmp.eq.s32.totalorder %s11, 0
    %p31 = por %p29, %p30
    %p32 = scmp.ne.s32.totalorder %s21, %s24
    %p33 = scmp.eq.s32.totalorder %s16, 1
    %p34 = por %p32, %p33
    %p35 = scmp.ne.s32.totalorder %s24, %s25
    %p36 = scmp.eq.s32.totalorder %s16, 0
    %p37 = por %p35, %p36
    %p38 = scmp.ne.s32.totalorder %s24, %s25
    %p39 = scmp.eq.s32.totalorder %s17, 1
    %p40 = por %p38, %p39
    %p42 = scmp.ne.s32.totalorder %s25, %s41
    %p43 = scmp.eq.s32.totalorder %s17, 0
    %p44 = por %p42, %p43
    %s46 = sadd.s32 %s45, 1
    %p49 = scmp.eq.s32.totalorder %s11, 1
    %p50 = scmp.ne.s32.totalorder %s45, %s47
    %p51 = scmp.eq.s32.totalorder %s11, 0
    %p52 = por %p50, %p51
    %p53 = scmp.ne.s32.totalorder %s45, %s47
    %p54 = scmp.eq.s32.totalorder %s16, 1
    %p55 = por %p53, %p54
    %p56 = scmp.ne.s32.totalorder %s47, %s48
    %p57 = scmp.eq.s32.totalorder %s16, 0
    %p58 = por %p56, %p57
    %p59 = scmp.ne.s32.totalorder %s47, %s48
    %p60 = scmp.eq.s32.totalorder %s17, 1
    %p61 = por %p59, %p60
    %p63 = scmp.ne.s32.totalorder %s48, %s62
    %p64 = scmp.eq.s32.totalorder %s17, 0
    %p65 = por %p63, %p64
    %s67 = sadd.s32 %s66, 1
    %p70 = scmp.eq.s32.totalorder %s11, 1
    %p71 = scmp.ne.s32.totalorder %s66, %s68
    %p72 = scmp.eq.s32.totalorder %s11, 0
    %p73 = por %p71, %p72
    %p74 = scmp.ne.s32.totalorder %s66, %s68
    %p75 = scmp.eq.s32.totalorder %s16, 1
    %p76 = por %p74, %p75
    %p77 = scmp.ne.s32.totalorder %s68, %s69
    %p78 = scmp.eq.s32.totalorder %s16, 0
    %p79 = por %p77, %p78
    %p80 = scmp.ne.s32.totalorder %s68, %s69
    %p81 = scmp.eq.s32.totalorder %s17, 1
    %p82 = por %p80, %p81
    %p84 = scmp.ne.s32.totalorder %s69, %s83
    %p85 = scmp.eq.s32.totalorder %s17, 0
    %p86 = por %p84, %p85
    %s88 = sadd.s32 %s87, 1
    %p91 = scmp.eq.s32.totalorder %s11, 1
    %p92 = scmp.ne.s32.totalorder %s87, %s89
    %p93 = scmp.eq.s32.totalorder %s11, 0
    %p94 = por %p92, %p93
    %p95 = scmp.ne.s32.totalorder %s87, %s89
    %p96 = scmp.eq.s32.totalorder %s16, 1
    %p97 = por %p95, %p96
    %p98 = scmp.ne.s32.totalorder %s89, %s90
    %p99 = scmp.eq.s32.totalorder %s16, 0
    %p100 = por %p98, %p99
    %p101 = scmp.ne.s32.totalorder %s89, %s90
    %p102 = scmp.eq.s32.totalorder %s17, 1
    %p103 = por %p101, %p102
    %p105 = scmp.ne.s32.totalorder %s90, %s104
    %p106 = scmp.eq.s32.totalorder %s17, 0
    %p107 = por %p105, %p106
    %s109 = sadd.s32 %s108, 1
    %p112 = scmp.eq.s32.totalorder %s11, 1
    %p113 = scmp.ne.s32.totalorder %s108, %s110
    %p114 = scmp.eq.s32.totalorder %s11, 0
    %p115 = por %p113, %p114
    %p116 = scmp.ne.s32.totalorder %s108, %s110
    %p117 = scmp.eq.s32.totalorder %s16, 1
    %p118 = por %p116, %p117
    %p119 = scmp.ne.s32.totalorder %s110, %s111
    %p120 = scmp.eq.s32.totalorder %s16, 0
    %p121 = por %p119, %p120
    %p122 = scmp.ne.s32.totalorder %s110, %s111
    %p123 = scmp.eq.s32.totalorder %s17, 1
    %p124 = por %p122, %p123
    %p126 = scmp.ne.s32.totalorder %s111, %s125
    %p127 = scmp.eq.s32.totalorder %s17, 0
    %p128 = por %p126, %p127
    %s129 = ssub.s32 %s11, %s18
    %p130 = scmp.eq.s32.totalorder %s129, 0
    %s132 = sadd.s32 %s131, 1
    %s133 = scalar_select %p130, %s131, %s132
    %p136 = pneg %p130
    %p137 = scmp.eq.s32.totalorder %s11, 1
    %p138 = por %p136, %p137
    %p139 = scmp.ne.s32.totalorder %s131, %s134
    %p140 = scmp.eq.s32.totalorder %s11, 0
    %p141 = por %p139, %p140
    %p142 = scmp.ne.s32.totalorder %s131, %s134
    %p143 = scmp.eq.s32.totalorder %s16, 1
    %p144 = por %p142, %p143
    %p145 = scmp.ne.s32.totalorder %s134, %s135
    %p146 = scmp.eq.s32.totalorder %s16, 0
    %p147 = por %p145, %p146
    %p148 = scmp.ne.s32.totalorder %s134, %s135
    %p149 = scmp.eq.s32.totalorder %s17, 1
    %p150 = por %p148, %p149
    %p152 = scmp.ne.s32.totalorder %s135, %s151
    %p153 = scmp.eq.s32.totalorder %s17, 0
    %p154 = por %p152, %p153
    %p155 = scmp.le.s32.totalorder 1, %s11
    %p156 = scmp.lt.s32.totalorder %s11, 3
    %p157 = pnand %p155, %p156
    %p158 = pneg %p157
    // Predicated region
    $region9: #{atom_normal_forward.1} parent=5 // pred_check
      _
    $region10: #{atom_normal_forward.1} parent=5 // pred_check_branch
      %160 = sbr.rel (%p157) target = $region12
    $region11: #{atom_normal_forward.1} parent=5 // pred_region
      %s161 = ssub.s32 %s11, 1
      // Predicated region
      $region13: #{atom_normal_forward.1} parent=11 // pred_check
        %p162 = pneg %p58
      $region14: #{atom_normal_forward.1} parent=11 // pred_check_branch
        %164 = sbr.rel (%p162) target = $region16
      $region15: #{atom_normal_forward.1} parent=11 // pred_region
        _
      $region16: #{atom_normal_forward.1} parent=11 // pred_fallthru
        _
      // Predicated region
      $region17: #{atom_normal_forward.1} parent=11 // pred_check
        %p165 = pneg %p79
      $region18: #{atom_normal_forward.1} parent=11 // pred_check_branch
        %167 = sbr.rel (%p165) target = $region20
      $region19: #{atom_normal_forward.1} parent=11 // pred_region
        _
      $region20: #{atom_normal_forward.1} parent=11 // pred_fallthru
        _
      // Predicated region
      $region21: #{atom_normal_forward.1} parent=11 // pred_check
        %p168 = pneg %p100
      $region22: #{atom_normal_forward.1} parent=11 // pred_check_branch
        %170 = sbr.rel (%p168) target = $region24
      $region23: #{atom_normal_forward.1} parent=11 // pred_region
        _
      $region24: #{atom_normal_forward.1} parent=11 // pred_fallthru
        _
      // Predicated region
      $region25: #{atom_normal_forward.1} parent=11 // pred_check
        %p171 = pneg %p121
      $region26: #{atom_normal_forward.1} parent=11 // pred_check_branch
        %173 = sbr.rel (%p171) target = $region28
      $region27: #{atom_normal_forward.1} parent=11 // pred_region
        _
      $region28: #{atom_normal_forward.1} parent=11 // pred_fallthru
        _
    $region12: #{atom_normal_forward.1} parent=5 // pred_fallthru
      _
    %p174 = scmp.lt.s32.totalorder %s11, 2
    // Predicated region
    $region29: #{atom_normal_forward.1} parent=5 // pred_check
      %p175 = pneg %p174
    $region30: #{atom_normal_forward.1} parent=5 // pred_check_branch
      %177 = sbr.rel (%p175) target = $region32
    $region31: #{atom_normal_forward.1} parent=5 // pred_region
      // Predicated region
      $region33: #{atom_normal_forward.1} parent=31 // pred_check
        %p178 = pneg %p31
      $region34: #{atom_normal_forward.1} parent=31 // pred_check_branch
        %180 = sbr.rel (%p178) target = $region36
      $region35: #{atom_normal_forward.1} parent=31 // pred_region
        %s181 = smul.u32 5, %s11
        %p182 = scmp.lt.s32.totalorder %s181, 9
        %s183 = scalar_select %p182, %s181, 9
        %s184 = smul.addr %s183, 8
        %s185 = scalar_lea.vmem %s0, %s184
        %s186 = smul.u32 5, %s11
      $region36: #{atom_normal_forward.1} parent=31 // pred_fallthru
        _
    $region32: #{atom_normal_forward.1} parent=5 // pred_fallthru
      _
    %p187 = scmp.le.s32.totalorder 1, %s11
    %p188 = scmp.lt.s32.totalorder %s11, 3
    %p189 = pnand %p187, %p188
    %p190 = pneg %p189
    // Predicated region
    $region37: #{atom_normal_forward.1} parent=5 // pred_check
      _
    $region38: #{atom_normal_forward.1} parent=5 // pred_check_branch
      %192 = sbr.rel (%p189) target = $region40
    $region39: #{atom_normal_forward.1} parent=5 // pred_region
      %s193 = ssub.s32 %s11, 1
      %s194 = smul.u32 5, %s16
      %p195 = scmp.lt.s32.totalorder %s194, 9
      %s196 = scalar_select %p195, %s194, 9
      %s197 = smul.addr %s196, 8
      %s198 = scalar_lea.vmem %s0, %s197
      %p199 = pneg %p37
      %p200 = pneg %p34
      %p201 = pneg %p58
      %p202 = pneg %p55
      %p203 = pneg %p79
      %p204 = pneg %p76
      %p205 = pneg %p100
      %p206 = pneg %p97
      %p207 = pneg %p121
      %p208 = pneg %p118
      %p209 = pneg %p147
      %p210 = pneg %p144
      %s211 = smul.u32 5, %s16
      %p212 = scmp.lt.s32.totalorder %s211, 9
      %s213 = scalar_select %p212, %s211, 9
      %s214 = smul.addr %s213, 8
      %s215 = scalar_lea.vmem %s5, %s214
      %s216 = smul.u32 5, %s16
      %p217 = scmp.lt.s32.totalorder %s216, 9
      %s218 = scalar_select %p217, %s216, 9
      %s219 = smul.addr %s218, 8
      %s220 = scalar_lea.vmem %s0, %s219
      %s221 = smul.u32 5, %s16
      %s222 = smul.u32 5, %s16
      %p223 = scmp.lt.s32.totalorder %s222, 9
      %s224 = scalar_select %p223, %s222, 9
      %s225 = smul.addr %s224, 8
      %s226 = scalar_lea.vmem %s5, %s225
      %s227 = smul.u32 5, %s16
      %v228 = vld [vmem:[%s1] sm:$0xff]
      %v229 = vld [vmem:[%s1 + $0x8] sm:$0xff]
      %v230 = vld [vmem:[%s1 + $0x10] sm:$0xff]
      %v231 = vld [vmem:[%s1 + $0x18] sm:$0xff]
      %v232 = vld [vmem:[%s1 + $0x20] sm:$0xff]
      %v233 = vld [vmem:[%s2] sm:$0xff]
      %v234 = vld [vmem:[%s2 + $0x8] sm:$0xff]
      %v235 = vld [vmem:[%s2 + $0x10] sm:$0xff]
      %v236 = vld [vmem:[%s2 + $0x18] sm:$0xff]
      %v237 = vld [vmem:[%s2 + $0x20] sm:$0xff]
      %v238 = vld [vmem:[%s220] sm:$0xff]
      %v239 = vld [vmem:[%s220 + $0x8] sm:$0xff]
      %v240 = vld [vmem:[%s220 + $0x10] sm:$0xff]
      %v241 = vld [vmem:[%s220 + $0x18] sm:$0xff]
      %v242 = vld [vmem:[%s220 + $0x20] sm:$0xff]
      %v243 = vmul.f32 %v233, %v238
      %v244 = vmul.f32 %v234, %v239
      %v245 = vmul.f32 %v235, %v240
      %v246 = vmul.f32 %v236, %v241
      %v247 = vmul.f32 %v237, %v242
      %v248 = vadd.f32 %v228, %v243
      %v249 = vadd.f32 %v229, %v244
      %v250 = vadd.f32 %v230, %v245
      %v251 = vadd.f32 %v231, %v246
      %v252 = vadd.f32 %v232, %v247
      %v253 = vld [vmem:[%s3] sm:$0xff]
      %v254 = vld [vmem:[%s3 + $0x8] sm:$0x3]
      %v255 = vld [vmem:[%s4] sm:$0x1]
      %v257 = vperm.slane %v255, 0
      %vm259 = vcmask 80896
      %v261 = vsel %vm259, %v248, 0
      %v264 = vsel %vm259, %v249, 0
      %v267 = vsel %vm259, %v250, 0
      %v270 = vsel %vm259, %v251, 0
      %v273 = vsel %vm259, %v252, 0
      %vm275 = vcmask 1041408
      %v277 = vsel %vm275, %v254, 0
      %279 = vmatpush.msra.mxu0 0.0
      %280 = vmatpush.msra.mxu0 0.0
      %281 = vmatpush.msra.mxu0 0.0
      %282 = vmatpush.msra.mxu0 0.0
      %283 = vmatpush.msra.mxu0 0.0
      %284 = vmatpush.msra.mxu0 0.0
      %285 = vmatpush.msra.mxu0 0.0
      %286 = vmatpush.msra.mxu0 0.0
      %287 = vmatpush.msra.mxu0 0.0
      %288 = vmatpush.msra.mxu0 0.0
      %289 = vmatpush.msra.mxu0 0.0
      %290 = vmatpush.msra.mxu0 0.0
      %291 = vmatpush.msra.mxu0 0.0
      %292 = vmatpush.msra.mxu0 0.0
      %293 = vmatpush.msra.mxu0 %v277
      %294 = vmatpush.msra.mxu0 %v253
      %295 = vmatmul.f32.gmra.mxu0 %v261
      %v296 = vpop.f32.mrf.mxu0
      %v297 = vadd.f32 %v257, %v296
      %298 = vmatmul.f32.gmra.mxu0 %v264
      %v299 = vpop.f32.mrf.mxu0
      %v300 = vadd.f32 %v257, %v299
      %301 = vmatmul.f32.gmra.mxu0 %v267
      %v302 = vpop.f32.mrf.mxu0
      %v303 = vadd.f32 %v257, %v302
      %304 = vmatmul.f32.gmra.mxu0 %v270
      %v305 = vpop.f32.mrf.mxu0
      %v306 = vadd.f32 %v257, %v305
      %307 = vmatmul.f32.gmra.mxu0 %v273
      %v308 = vpop.f32.mrf.mxu0
      %v309 = vadd.f32 %v257, %v308
      %310 = vdwg.mxu0
      %311 = vst.msk [vmem:[%s226] sm:$0xff] %vm259, %v297
      %312 = vst.msk [vmem:[%s226 + $0x8] sm:$0xff] %vm259, %v300
      %313 = vst.msk [vmem:[%s226 + $0x10] sm:$0xff] %vm259, %v303
      %314 = vst.msk [vmem:[%s226 + $0x18] sm:$0xff] %vm259, %v306
      %315 = vst.msk [vmem:[%s226 + $0x20] sm:$0xff] %vm259, %v309
      %s316 = smul.u32 5, %s16
      %p317 = scmp.lt.s32.totalorder %s316, 9
      %s318 = scalar_select %p317, %s316, 9
      %s319 = smul.addr %s318, 8
      %s320 = scalar_lea.vmem %s5, %s319
      // Predicated region
      $region41: #{atom_normal_forward.1} parent=39 // pred_check
        %p321 = pneg %p144
      $region42: #{atom_normal_forward.1} parent=39 // pred_check_branch
        %323 = sbr.rel (%p321) target = $region44
      $region43: #{atom_normal_forward.1} parent=39 // pred_region
        %s324 = smul.u32 5, %s16
      $region44: #{atom_normal_forward.1} parent=39 // pred_fallthru
        _
    $region40: #{atom_normal_forward.1} parent=5 // pred_fallthru
      _
    %p325 = scmp.le.s32.totalorder 2, %s11
    // Predicated region
    $region45: #{atom_normal_forward.1} parent=5 // pred_check
      %p326 = pneg %p325
    $region46: #{atom_normal_forward.1} parent=5 // pred_check_branch
      %328 = sbr.rel (%p326) target = $region48
    $region47: #{atom_normal_forward.1} parent=5 // pred_region
      %s329 = ssub.s32 %s11, 2
      // Predicated region
      $region49: #{atom_normal_forward.1} parent=47 // pred_check
        %p330 = pneg %p150
      $region50: #{atom_normal_forward.1} parent=47 // pred_check_branch
        %332 = sbr.rel (%p330) target = $region52
      $region51: #{atom_normal_forward.1} parent=47 // pred_region
        %s333 = smul.u32 5, %s17
        %p334 = scmp.lt.s32.totalorder %s333, 9
        %s335 = scalar_select %p334, %s333, 9
        %s336 = smul.addr %s335, 8
        %s337 = scalar_lea.vmem %s5, %s336
      $region52: #{atom_normal_forward.1} parent=47 // pred_fallthru
        _
    $region48: #{atom_normal_forward.1} parent=5 // pred_fallthru
      _
  $region6: #{atom_normal_forward.1} parent=0 // loop_footer
    %s15 = sadd.s32 1, %s11
  $region7: #{atom_normal_forward.1} parent=0 // loop_footer_branch
    %10 = sbr.rel target = $region3
  $region8: #{atom_normal_forward.1} parent=0 // loop_exit
    _

</llo_original>
